<compile_context>
chip_gen: v5e
topology: v5e:2x2
jax: 0.10.0
libtpu: 0.0.40
codegen_flags: <defaults>
</compile_context>

<pallas_src>
import functools

import jax
import jax.numpy as jnp
from jax import lax
from jax.experimental import pallas as pl
from jax.experimental.pallas import tpu as pltpu


def _attention_kernel(v_ref, enc_ref, out_ref, *, valid_s):
    """One grid step == one block of BB (multiple of 8) batch rows.

    v_ref:   (BB, 1, H)      hidden state already projected through W (stream dtype)
    enc_ref: (BB, S_pad, H)  encoder outputs, S_pad % 128 == 0 (stream dtype)
    out_ref: (BB, S_pad)     softmax attention weights, f32, lane/sublane dense
    """
    # H-contraction on the MXU with f32 accumulation (no (BB,S,H) temporary,
    # no XLU lane-reduce).  Matches the flash-attention 'bqd,bkd->bqk' pattern.
    s3 = jnp.einsum("bqh,bsh->bqs", v_ref[...], enc_ref[...],
                    preferred_element_type=jnp.float32)        # (BB, 1, S_pad) f32
    scores = s3[:, 0, :]                                       # (BB, S_pad) f32

    if valid_s is not None:  # static: only emitted when S was padded
        col = lax.broadcasted_iota(jnp.int32, scores.shape, 1)
        scores = jnp.where(col < valid_s, scores, -1e30)       # mask padded lanes

    # Numerically stable softmax over S_pad (padded lanes contribute exp(.)=0).
    m = jnp.max(scores, axis=-1, keepdims=True)                # (BB, 1)
    p = jnp.exp(scores - m)                                    # (BB, S_pad)
    l = jnp.sum(p, axis=-1, keepdims=True)                     # (BB, 1)
    out_ref[...] = (p / l).astype(out_ref.dtype)               # exact normalization


def _tpu_info():
    """Returns (vmem_capacity_bytes, capacity_known, num_tensorcores_per_chip)."""
    vmem_cap, known = 64 << 20, False          # conservative fallback (v7x per-TC)
    try:
        cap = getattr(pltpu.get_tpu_info(), "vmem_capacity_bytes", None)
        if cap:
            vmem_cap, known = int(cap), True
    except Exception:
        pass
    num_tc = 1
    try:
        kind = jax.devices()[0].device_kind.lower()
        if "v7" in kind:                       # v7x: 2 TensorCores per chip
            num_tc = 2
    except Exception:
        pass
    return vmem_cap, known, num_tc


def _row_bytes(s_pad, h_vmem, stream_itemsize):
    """Conservative VMEM bytes per batch row (double-buffered blocks + f32 temps)."""
    enc = s_pad * h_vmem * stream_itemsize
    v = 8 * max(h_vmem, 128) * stream_itemsize   # (1,H) row pads to an (8,128) granule
    out = s_pad * 4
    inter = 6 * s_pad * 4                        # f32 scores / exp / probs temporaries
    return 2 * (enc + v + out) + inter


def _choose_block_b(b_pad, row_bytes, budget_bytes, min_steps):
    """Largest multiple-of-8 divisor of b_pad that fits the VMEM budget and (on
    multi-TensorCore chips) leaves at least `min_steps` parallel grid steps."""
    cap = max(8, (int(budget_bytes) // max(int(row_bytes), 1)) // 8 * 8)
    best = 8
    for d in range(8, b_pad + 1, 8):
        if b_pad % d:
            continue
        if d > cap:
            break
        if (b_pad // d) >= min_steps or d == 8:
            best = d
    return best


def attention_forward(hidden, encoder_outputs, weight, bias, *, stream_dtype=None):
    """hidden: (1, B, H); encoder_outputs: (B, S, H);
    weight: (H, H) torch nn.Linear weight (out, in); bias: (H,).
    stream_dtype: dtype used to stream encoder_outputs / v from HBM (e.g. bf16 for
    ~2x bandwidth on this memory-bound kernel); softmax math is always f32."""
    del bias  # hidden·bias is constant per batch row -> cancels exactly under softmax
    B, S, H = encoder_outputs.shape
    if stream_dtype is None:
        stream_dtype = encoder_outputs.dtype

    # Project the hidden state through W once: v[b, h] = sum_k hidden[0, b, k] * W[k, h].
    v = jnp.dot(hidden[0], weight, preferred_element_type=jnp.float32)   # (B, H)

    # Pad so every block is sublane (8) / lane (128) dense.
    b_pad = -(-B // 8) * 8
    s_pad = -(-S // 128) * 128
    enc = encoder_outputs.astype(stream_dtype)
    v = v.astype(stream_dtype).reshape(B, 1, H)
    if b_pad != B or s_pad != S:
        enc = jnp.pad(enc, ((0, b_pad - B), (0, s_pad - S), (0, 0)))
        v = jnp.pad(v, ((0, b_pad - B), (0, 0), (0, 0)))

    itemsize = jnp.dtype(stream_dtype).itemsize
    vmem_cap, cap_known, num_tc = _tpu_info()
    budget = max(16 << 20, vmem_cap // 2 - (4 << 20))          # blocks + double buffers
    h_vmem = -(-H // 128) * 128                                # lane padding of H in VMEM
    row_bytes = _row_bytes(s_pad, h_vmem, itemsize)
    bb = _choose_block_b(b_pad, row_bytes, budget,
                         min_steps=(2 if num_tc > 1 else 1))

    req = row_bytes * bb + (4 << 20)
    vmem_limit = max(req, 32 << 20)
    if cap_known:
        vmem_limit = min(vmem_limit, vmem_cap - (8 << 20))

    grid = (b_pad // bb,)
    cost = pl.CostEstimate(
        flops=2 * b_pad * s_pad * H + 6 * b_pad * s_pad,
        transcendentals=b_pad * s_pad,
        bytes_accessed=(b_pad * s_pad * H * itemsize          # encoder stream
                        + b_pad * H * itemsize                # projected hidden
                        + b_pad * s_pad * 4))                 # f32 output

    kernel = functools.partial(_attention_kernel,
                               valid_s=(S if s_pad != S else None))

    out = pl.pallas_call(
        kernel,
        out_shape=jax.ShapeDtypeStruct((b_pad, s_pad), jnp.float32),
        grid=grid,
        in_specs=[
            pl.BlockSpec((bb, 1, H), lambda i: (i, 0, 0)),      # projected hidden block
            pl.BlockSpec((bb, s_pad, H), lambda i: (i, 0, 0)),  # encoder outputs block
        ],
        out_specs=pl.BlockSpec((bb, s_pad), lambda i: (i, 0)),  # dense (sublane+lane) store
        compiler_params=pltpu.CompilerParams(
            dimension_semantics=("parallel",),
            vmem_limit_bytes=int(vmem_limit)),
        cost_estimate=cost,
    )(v, enc)

    return out[:B, :S][None, None]                              # (1, 1, B, S)


def _reference(hidden, encoder_outputs, weight, bias):
    # Pure-JAX reference of the PyTorch forward (including the bias, to verify the
    # bias-drop is exact under softmax).
    proj = jnp.einsum("bsh,kh->bsk", encoder_outputs, weight) + bias
    scores = jnp.einsum("bsk,bk->bs", proj, hidden[0])
    return jax.nn.softmax(scores, axis=-1)[None, None]


if __name__ == "__main__":
    B, S, H = 2, 8, 32   # batch, seq_len (<= max_length), hidden_size

    key = jax.random.PRNGKey(0)
    k_h, k_e, k_w, k_b = jax.random.split(key, 4)

    hidden = jax.random.normal(k_h, (1, B, H), dtype=jnp.float32)
    encoder_outputs = jax.random.normal(k_e, (B, S, H), dtype=jnp.float32)

    # Deterministic nn.Linear(H, H) parameters (uniform like PyTorch default init).
    bound = 1.0 / (H ** 0.5)
    weight = jax.random.uniform(k_w, (H, H), jnp.float32, -bound, bound)  # (out, in)
    bias = jax.random.uniform(k_b, (H,), jnp.float32, -bound, bound)

    ref = _reference(hidden, encoder_outputs, weight, bias)

    # f32 streaming path: matches the PyTorch module numerics.
    out = jax.block_until_ready(attention_forward(hidden, encoder_outputs, weight, bias))
    assert out.shape == (1, 1, B, S), out.shape
    assert jnp.allclose(out, ref, atol=2e-3, rtol=2e-3), (out, ref)
    assert jnp.allclose(out.sum(-1), 1.0, atol=1e-5)

    # bf16 streaming path (the memory-bound fast path on v5e/v6e/v7x): encoder
    # outputs cross HBM at half the bytes; accumulation/softmax stay f32 in-kernel.
    out_bf16 = jax.block_until_ready(
        attention_forward(hidden, encoder_outputs, weight, bias,
                          stream_dtype=jnp.bfloat16))
    assert out_bf16.shape == (1, 1, B, S)
    assert jnp.allclose(out_bf16, ref, atol=5e-2, rtol=5e-2), (out_bf16, ref)

    print("KERNEL_OK")
</pallas_src>

<mosaic_0001>
module attributes {stable_mosaic.version = 11 : i64} {
  func.func @_attention_kernel(%arg0: i32, %arg1: memref<8x1x32xf32, #tpu.memory_space<vmem>>, %arg2: memref<8x128x32xf32, #tpu.memory_space<vmem>>, %arg3: memref<8x128xf32, #tpu.memory_space<vmem>>) attributes {dimension_semantics = [#tpu.dimension_semantics<parallel>], iteration_bounds = array<i64: 1>, scalar_prefetch = 0 : i64, scratch_operands = 0 : i64, tpu.core_type = #tpu.core_type<tc>, window_params = [{transform_indices = @transform_0, window_bounds = array<i64: 8, 1, 32>}, {transform_indices = @transform_1, window_bounds = array<i64: 8, 128, 32>}, {transform_indices = @transform_2, window_bounds = array<i64: 8, 128>}]} {
    %c0 = arith.constant 0 : index
    %c0_0 = arith.constant 0 : index
    %c0_1 = arith.constant 0 : index
    %0 = vector.load %arg1[%c0, %c0_0, %c0_1] : memref<8x1x32xf32, #tpu.memory_space<vmem>>, vector<8x1x32xf32>
    %c0_2 = arith.constant 0 : index
    %c0_3 = arith.constant 0 : index
    %c0_4 = arith.constant 0 : index
    %1 = vector.load %arg2[%c0_2, %c0_3, %c0_4] : memref<8x128x32xf32, #tpu.memory_space<vmem>>, vector<8x128x32xf32>
    "tpu.trace_start"() <{level = 10 : i32, message = "bqh,bsh->bqs"}> : () -> ()
    %cst = arith.constant dense<0.000000e+00> : vector<8x1x128xf32>
    %2 = tpu.matmul %0, %1, %cst {dimension_numbers = #tpu.dot_dimension_numbers<[2], [2], [1], [1], [0, 0, 0, 1, 1, 1], [0], [0]>} : vector<8x1x32xf32>, vector<8x128x32xf32>, vector<8x1x128xf32> -> vector<8x1x128xf32>
    "tpu.trace_stop"() : () -> ()
    %3 = vector.shape_cast %2 : vector<8x1x128xf32> to vector<8x128xf32>
    %4 = tpu.iota {dimensions = array<i32: 1>} : vector<8x128xi32>
    %c8_i32 = arith.constant 8 : i32
    %5 = vector.broadcast %c8_i32 : i32 to vector<8x128xi32>
    %6 = arith.cmpi slt, %4, %5 : vector<8x128xi32>
    %cst_5 = arith.constant -1.000000e+30 : f32
    %7 = vector.broadcast %cst_5 : f32 to vector<8x128xf32>
    %8 = arith.select %6, %3, %7 : vector<8x128xi1>, vector<8x128xf32>
    %cst_6 = arith.constant dense<0xFF800000> : vector<8xf32>
    %9 = vector.multi_reduction <maximumf>, %8, %cst_6 [1] : vector<8x128xf32> to vector<8xf32>
    %10 = vector.shape_cast %9 : vector<8xf32> to vector<8x1xf32>
    %11 = vector.broadcast %10 : vector<8x1xf32> to vector<8x128xf32>
    %12 = arith.subf %8, %11 : vector<8x128xf32>
    %13 = math.exp %12 : vector<8x128xf32>
    %cst_7 = arith.constant dense<0.000000e+00> : vector<8xf32>
    %14 = vector.multi_reduction <add>, %13, %cst_7 [1] : vector<8x128xf32> to vector<8xf32>
    %15 = vector.shape_cast %14 : vector<8xf32> to vector<8x1xf32>
    %16 = vector.broadcast %15 : vector<8x1xf32> to vector<8x128xf32>
    %17 = arith.divf %13, %16 : vector<8x128xf32>
    %c0_8 = arith.constant 0 : index
    %c0_9 = arith.constant 0 : index
    %18 = vector.load %arg3[%c0_8, %c0_9] : memref<8x128xf32, #tpu.memory_space<vmem>>, vector<8x128xf32>
    tpu.vector_store %arg3[%c0_8, %c0_9], %17 {strides = array<i32>} : memref<8x128xf32, #tpu.memory_space<vmem>>, vector<8x128xf32>,
    return
  }
  func.func @transform_0(%arg0: i32) -> (i32, i32, i32) {
    %c0_i32 = arith.constant 0 : i32
    %c0_i32_0 = arith.constant 0 : i32
    %c0_i32_1 = arith.constant 0 : i32
    return %arg0, %c0_i32, %c0_i32_0 : i32, i32, i32
  }
  func.func @transform_1(%arg0: i32) -> (i32, i32, i32) {
    %c0_i32 = arith.constant 0 : i32
    %c0_i32_0 = arith.constant 0 : i32
    %c0_i32_1 = arith.constant 0 : i32
    return %arg0, %c0_i32, %c0_i32_0 : i32, i32, i32
  }
  func.func @transform_2(%arg0: i32) -> (i32, i32) {
    %c0_i32 = arith.constant 0 : i32
    %c0_i32_0 = arith.constant 0 : i32
    return %arg0, %c0_i32 : i32, i32
  }
}

</mosaic_0001>

<llo_original>
// kernel: tpu_custom_call.1
$region0: #{tpu_custom_call.1}
  #allocation0 [shape = 'u32[]', space=smem, size = 0x4, offset = 0x4, fixed_abs, tag = 'smem constant byte address 0x4 - core index']
  #allocation1 [shape = 'u32[72,128]{1,0:T(1,128)}', space=vmem, size = 0x9000, scoped, tag = 'internal scratch']
  %s0 = inlined_call_operand.vmem [shape: f32[8,1,32], index: 0, kind: input, shape index: {}]
  %s1 = inlined_call_operand.vmem [shape: f32[8,128,32], index: 1, kind: input, shape index: {}]
  %s2 = inlined_call_operand.hbm [shape: f32[8,128], index: 2, kind: output, shape index: {}]
  %s3 = sld [smem:[#allocation0]]
  $region18: #{tpu_custom_call.1} parent=0
    _
  %s5 = ssub.s32 1, %s3
  %s6 = scalar_select 0, %s5, %s3
  $region1: #{tpu_custom_call.1} parent=0
    #allocation2 [shape = 'u8[4096]{0}', space=vmem, size = 0x1000, scoped, tag = 'output window, operand 0, single buffered']
    #allocation3 [shape = 's32[1]{0}', space=sflag, size = 0x4, scoped, tag = 'scoped memory for tpu_custom_call.1']
    %7 = vsyncpa [#allocation3], 0
    // Predicated region
    $region2: #{tpu_custom_call.1} parent=1 // pred_check
      _
    $region3: #{tpu_custom_call.1} parent=1 // pred_check_branch
      %9 = sbr.rel (0) target = $region5
    $region4: #{tpu_custom_call.1} parent=1 // pred_region
      _
    $region5: #{tpu_custom_call.1} parent=1 // pred_fallthru
      _
    // Predicated region
    $region6: #{tpu_custom_call.1} parent=1 // pred_check
      _
    $region7: #{tpu_custom_call.1} parent=1 // pred_check_branch
      %11 = sbr.rel (0) target = $region9
    $region8: #{tpu_custom_call.1} parent=1 // pred_region
      _
    $region9: #{tpu_custom_call.1} parent=1 // pred_fallthru
      _
    %v12 = vld [vmem:[%s0] sm:$0x1]
    %v13 = vld [vmem:[%s0 + $0x1] sm:$0x1]
    %v14 = vld [vmem:[%s0 + $0x2] sm:$0x1]
    %v15 = vld [vmem:[%s0 + $0x3] sm:$0x1]
    %v16 = vld [vmem:[%s0 + $0x4] sm:$0x1]
    %v17 = vld [vmem:[%s0 + $0x5] sm:$0x1]
    %v18 = vld [vmem:[%s0 + $0x6] sm:$0x1]
    %v19 = vld [vmem:[%s0 + $0x7] sm:$0x1]
    %v20 = vld [vmem:[%s1] sm:$0xff]
    %v21 = vld [vmem:[%s1 + $0x8] sm:$0xff]
    %v22 = vld [vmem:[%s1 + $0x10] sm:$0xff]
    %v23 = vld [vmem:[%s1 + $0x18] sm:$0xff]
    %v24 = vld [vmem:[%s1 + $0x20] sm:$0xff]
    %v25 = vld [vmem:[%s1 + $0x28] sm:$0xff]
    %v26 = vld [vmem:[%s1 + $0x30] sm:$0xff]
    %v27 = vld [vmem:[%s1 + $0x38] sm:$0xff]
    %v28 = vld [vmem:[%s1 + $0x40] sm:$0xff]
    %v29 = vld [vmem:[%s1 + $0x48] sm:$0xff]
    %v30 = vld [vmem:[%s1 + $0x50] sm:$0xff]
    %v31 = vld [vmem:[%s1 + $0x58] sm:$0xff]
    %v32 = vld [vmem:[%s1 + $0x60] sm:$0xff]
    %v33 = vld [vmem:[%s1 + $0x68] sm:$0xff]
    %v34 = vld [vmem:[%s1 + $0x70] sm:$0xff]
    %v35 = vld [vmem:[%s1 + $0x78] sm:$0xff]
    %v36 = vld [vmem:[%s1 + $0x80] sm:$0xff]
    %v37 = vld [vmem:[%s1 + $0x88] sm:$0xff]
    %v38 = vld [vmem:[%s1 + $0x90] sm:$0xff]
    %v39 = vld [vmem:[%s1 + $0x98] sm:$0xff]
    %v40 = vld [vmem:[%s1 + $0xa0] sm:$0xff]
    %v41 = vld [vmem:[%s1 + $0xa8] sm:$0xff]
    %v42 = vld [vmem:[%s1 + $0xb0] sm:$0xff]
    %v43 = vld [vmem:[%s1 + $0xb8] sm:$0xff]
    %v44 = vld [vmem:[%s1 + $0xc0] sm:$0xff]
    %v45 = vld [vmem:[%s1 + $0xc8] sm:$0xff]
    %v46 = vld [vmem:[%s1 + $0xd0] sm:$0xff]
    %v47 = vld [vmem:[%s1 + $0xd8] sm:$0xff]
    %v48 = vld [vmem:[%s1 + $0xe0] sm:$0xff]
    %v49 = vld [vmem:[%s1 + $0xe8] sm:$0xff]
    %v50 = vld [vmem:[%s1 + $0xf0] sm:$0xff]
    %v51 = vld [vmem:[%s1 + $0xf8] sm:$0xff]
    %v52 = vld [vmem:[%s1 + $0x100] sm:$0xff]
    %v53 = vld [vmem:[%s1 + $0x108] sm:$0xff]
    %v54 = vld [vmem:[%s1 + $0x110] sm:$0xff]
    %v55 = vld [vmem:[%s1 + $0x118] sm:$0xff]
    %v56 = vld [vmem:[%s1 + $0x120] sm:$0xff]
    %v57 = vld [vmem:[%s1 + $0x128] sm:$0xff]
    %v58 = vld [vmem:[%s1 + $0x130] sm:$0xff]
    %v59 = vld [vmem:[%s1 + $0x138] sm:$0xff]
    %v60 = vld [vmem:[%s1 + $0x140] sm:$0xff]
    %v61 = vld [vmem:[%s1 + $0x148] sm:$0xff]
    %v62 = vld [vmem:[%s1 + $0x150] sm:$0xff]
    %v63 = vld [vmem:[%s1 + $0x158] sm:$0xff]
    %v64 = vld [vmem:[%s1 + $0x160] sm:$0xff]
    %v65 = vld [vmem:[%s1 + $0x168] sm:$0xff]
    %v66 = vld [vmem:[%s1 + $0x170] sm:$0xff]
    %v67 = vld [vmem:[%s1 + $0x178] sm:$0xff]
    %v68 = vld [vmem:[%s1 + $0x180] sm:$0xff]
    %v69 = vld [vmem:[%s1 + $0x188] sm:$0xff]
    %v70 = vld [vmem:[%s1 + $0x190] sm:$0xff]
    %v71 = vld [vmem:[%s1 + $0x198] sm:$0xff]
    %v72 = vld [vmem:[%s1 + $0x1a0] sm:$0xff]
    %v73 = vld [vmem:[%s1 + $0x1a8] sm:$0xff]
    %v74 = vld [vmem:[%s1 + $0x1b0] sm:$0xff]
    %v75 = vld [vmem:[%s1 + $0x1b8] sm:$0xff]
    %v76 = vld [vmem:[%s1 + $0x1c0] sm:$0xff]
    %v77 = vld [vmem:[%s1 + $0x1c8] sm:$0xff]
    %v78 = vld [vmem:[%s1 + $0x1d0] sm:$0xff]
    %v79 = vld [vmem:[%s1 + $0x1d8] sm:$0xff]
    %v80 = vld [vmem:[%s1 + $0x1e0] sm:$0xff]
    %v81 = vld [vmem:[%s1 + $0x1e8] sm:$0xff]
    %v82 = vld [vmem:[%s1 + $0x1f0] sm:$0xff]
    %v83 = vld [vmem:[%s1 + $0x1f8] sm:$0xff]
    %v84 = vld [vmem:[%s1 + $0x200] sm:$0xff]
    %v85 = vld [vmem:[%s1 + $0x208] sm:$0xff]
    %v86 = vld [vmem:[%s1 + $0x210] sm:$0xff]
    %v87 = vld [vmem:[%s1 + $0x218] sm:$0xff]
    %v88 = vld [vmem:[%s1 + $0x220] sm:$0xff]
    %v89 = vld [vmem:[%s1 + $0x228] sm:$0xff]
    %v90 = vld [vmem:[%s1 + $0x230] sm:$0xff]
    %v91 = vld [vmem:[%s1 + $0x238] sm:$0xff]
    %v92 = vld [vmem:[%s1 + $0x240] sm:$0xff]
    %v93 = vld [vmem:[%s1 + $0x248] sm:$0xff]
    %v94 = vld [vmem:[%s1 + $0x250] sm:$0xff]
    %v95 = vld [vmem:[%s1 + $0x258] sm:$0xff]
    %v96 = vld [vmem:[%s1 + $0x260] sm:$0xff]
    %v97 = vld [vmem:[%s1 + $0x268] sm:$0xff]
    %v98 = vld [vmem:[%s1 + $0x270] sm:$0xff]
    %v99 = vld [vmem:[%s1 + $0x278] sm:$0xff]
    %v100 = vld [vmem:[%s1 + $0x280] sm:$0xff]
    %v101 = vld [vmem:[%s1 + $0x288] sm:$0xff]
    %v102 = vld [vmem:[%s1 + $0x290] sm:$0xff]
    %v103 = vld [vmem:[%s1 + $0x298] sm:$0xff]
    %v104 = vld [vmem:[%s1 + $0x2a0] sm:$0xff]
    %v105 = vld [vmem:[%s1 + $0x2a8] sm:$0xff]
    %v106 = vld [vmem:[%s1 + $0x2b0] sm:$0xff]
    %v107 = vld [vmem:[%s1 + $0x2b8] sm:$0xff]
    %v108 = vld [vmem:[%s1 + $0x2c0] sm:$0xff]
    %v109 = vld [vmem:[%s1 + $0x2c8] sm:$0xff]
    %v110 = vld [vmem:[%s1 + $0x2d0] sm:$0xff]
    %v111 = vld [vmem:[%s1 + $0x2d8] sm:$0xff]
    %v112 = vld [vmem:[%s1 + $0x2e0] sm:$0xff]
    %v113 = vld [vmem:[%s1 + $0x2e8] sm:$0xff]
    %v114 = vld [vmem:[%s1 + $0x2f0] sm:$0xff]
    %v115 = vld [vmem:[%s1 + $0x2f8] sm:$0xff]
    %v116 = vld [vmem:[%s1 + $0x300] sm:$0xff]
    %v117 = vld [vmem:[%s1 + $0x308] sm:$0xff]
    %v118 = vld [vmem:[%s1 + $0x310] sm:$0xff]
    %v119 = vld [vmem:[%s1 + $0x318] sm:$0xff]
    %v120 = vld [vmem:[%s1 + $0x320] sm:$0xff]
    %v121 = vld [vmem:[%s1 + $0x328] sm:$0xff]
    %v122 = vld [vmem:[%s1 + $0x330] sm:$0xff]
    %v123 = vld [vmem:[%s1 + $0x338] sm:$0xff]
    %v124 = vld [vmem:[%s1 + $0x340] sm:$0xff]
    %v125 = vld [vmem:[%s1 + $0x348] sm:$0xff]
    %v126 = vld [vmem:[%s1 + $0x350] sm:$0xff]
    %v127 = vld [vmem:[%s1 + $0x358] sm:$0xff]
    %v128 = vld [vmem:[%s1 + $0x360] sm:$0xff]
    %v129 = vld [vmem:[%s1 + $0x368] sm:$0xff]
    %v130 = vld [vmem:[%s1 + $0x370] sm:$0xff]
    %v131 = vld [vmem:[%s1 + $0x378] sm:$0xff]
    %v132 = vld [vmem:[%s1 + $0x380] sm:$0xff]
    %v133 = vld [vmem:[%s1 + $0x388] sm:$0xff]
    %v134 = vld [vmem:[%s1 + $0x390] sm:$0xff]
    %v135 = vld [vmem:[%s1 + $0x398] sm:$0xff]
    %v136 = vld [vmem:[%s1 + $0x3a0] sm:$0xff]
    %v137 = vld [vmem:[%s1 + $0x3a8] sm:$0xff]
    %v138 = vld [vmem:[%s1 + $0x3b0] sm:$0xff]
    %v139 = vld [vmem:[%s1 + $0x3b8] sm:$0xff]
    %v140 = vld [vmem:[%s1 + $0x3c0] sm:$0xff]
    %v141 = vld [vmem:[%s1 + $0x3c8] sm:$0xff]
    %v142 = vld [vmem:[%s1 + $0x3d0] sm:$0xff]
    %v143 = vld [vmem:[%s1 + $0x3d8] sm:$0xff]
    %v144 = vld [vmem:[%s1 + $0x3e0] sm:$0xff]
    %v145 = vld [vmem:[%s1 + $0x3e8] sm:$0xff]
    %v146 = vld [vmem:[%s1 + $0x3f0] sm:$0xff]
    %v147 = vld [vmem:[%s1 + $0x3f8] sm:$0xff]
    %vm148 = vcmask 261120
    %v150 = vsel %vm148, %v12, 0
    %v153 = vsel %vm148, %v20, 0
    %v156 = vsel %vm148, %v21, 0
    %v159 = vsel %vm148, %v22, 0
    %v162 = vsel %vm148, %v23, 0
    %v165 = vsel %vm148, %v24, 0
    %v168 = vsel %vm148, %v25, 0
    %v171 = vsel %vm148, %v26, 0
    %v174 = vsel %vm148, %v27, 0
    %v177 = vsel %vm148, %v28, 0
    %v180 = vsel %vm148, %v29, 0
    %v183 = vsel %vm148, %v30, 0
    %v186 = vsel %vm148, %v31, 0
    %v189 = vsel %vm148, %v32, 0
    %v192 = vsel %vm148, %v33, 0
    %v195 = vsel %vm148, %v34, 0
    %v198 = vsel %vm148, %v35, 0
    %200 = vmatpush.xpose.msra.mxu0 %v198
    %201 = vmatpush.xpose.msra.mxu0 %v195
    %202 = vmatpush.xpose.msra.mxu0 %v192
    %203 = vmatpush.xpose.msra.mxu0 %v189
    %204 = vmatpush.xpose.msra.mxu0 %v186
    %205 = vmatpush.xpose.msra.mxu0 %v183
    %206 = vmatpush.xpose.msra.mxu0 %v180
    %207 = vmatpush.xpose.msra.mxu0 %v177
    %208 = vmatpush.xpose.msra.mxu0 %v174
    %209 = vmatpush.xpose.msra.mxu0 %v171
    %210 = vmatpush.xpose.msra.mxu0 %v168
    %211 = vmatpush.xpose.msra.mxu0 %v165
    %212 = vmatpush.xpose.msra.mxu0 %v162
    %213 = vmatpush.xpose.msra.mxu0 %v159
    %214 = vmatpush.xpose.msra.mxu0 %v156
    %215 = vmatpush.xpose.msra.mxu0 %v153
    %216 = vmatmul.f32.gmra.mxu0 %v150
    %v217 = vpop.f32.mrf.mxu0
    %v218 = vadd.f32 0.0, %v217
    %219 = vdwg.mxu0
    %v221 = vsel %vm148, %v13, 0
    %v224 = vsel %vm148, %v36, 0
    %v227 = vsel %vm148, %v37, 0
    %v230 = vsel %vm148, %v38, 0
    %v233 = vsel %vm148, %v39, 0
    %v236 = vsel %vm148, %v40, 0
    %v239 = vsel %vm148, %v41, 0
    %v242 = vsel %vm148, %v42, 0
    %v245 = vsel %vm148, %v43, 0
    %v248 = vsel %vm148, %v44, 0
    %v251 = vsel %vm148, %v45, 0
    %v254 = vsel %vm148, %v46, 0
    %v257 = vsel %vm148, %v47, 0
    %v260 = vsel %vm148, %v48, 0
    %v263 = vsel %vm148, %v49, 0
    %v266 = vsel %vm148, %v50, 0
    %v269 = vsel %vm148, %v51, 0
    %271 = vmatpush.xpose.msra.mxu0 %v269
    %272 = vmatpush.xpose.msra.mxu0 %v266
    %273 = vmatpush.xpose.msra.mxu0 %v263
    %274 = vmatpush.xpose.msra.mxu0 %v260
    %275 = vmatpush.xpose.msra.mxu0 %v257
    %276 = vmatpush.xpose.msra.mxu0 %v254
    %277 = vmatpush.xpose.msra.mxu0 %v251
    %278 = vmatpush.xpose.msra.mxu0 %v248
    %279 = vmatpush.xpose.msra.mxu0 %v245
    %280 = vmatpush.xpose.msra.mxu0 %v242
    %281 = vmatpush.xpose.msra.mxu0 %v239
    %282 = vmatpush.xpose.msra.mxu0 %v236
    %283 = vmatpush.xpose.msra.mxu0 %v233
    %284 = vmatpush.xpose.msra.mxu0 %v230
    %285 = vmatpush.xpose.msra.mxu0 %v227
    %286 = vmatpush.xpose.msra.mxu0 %v224
    %287 = vmatmul.f32.gmra.mxu0 %v221
    %v288 = vpop.f32.mrf.mxu0
    %v289 = vadd.f32 0.0, %v288
    %290 = vdwg.mxu0
    %v292 = vsel %vm148, %v14, 0
    %v295 = vsel %vm148, %v52, 0
    %v298 = vsel %vm148, %v53, 0
    %v301 = vsel %vm148, %v54, 0
    %v304 = vsel %vm148, %v55, 0
    %v307 = vsel %vm148, %v56, 0
    %v310 = vsel %vm148, %v57, 0
    %v313 = vsel %vm148, %v58, 0
    %v316 = vsel %vm148, %v59, 0
    %v319 = vsel %vm148, %v60, 0
    %v322 = vsel %vm148, %v61, 0
    %v325 = vsel %vm148, %v62, 0
    %v328 = vsel %vm148, %v63, 0
    %v331 = vsel %vm148, %v64, 0
    %v334 = vsel %vm148, %v65, 0
    %v337 = vsel %vm148, %v66, 0
    %v340 = vsel %vm148, %v67, 0
    %342 = vmatpush.xpose.msra.mxu0 %v340
    %343 = vmatpush.xpose.msra.mxu0 %v337
    %344 = vmatpush.xpose.msra.mxu0 %v334
    %345 = vmatpush.xpose.msra.mxu0 %v331
    %346 = vmatpush.xpose.msra.mxu0 %v328
    %347 = vmatpush.xpose.msra.mxu0 %v325
    %348 = vmatpush.xpose.msra.mxu0 %v322
    %349 = vmatpush.xpose.msra.mxu0 %v319
    %350 = vmatpush.xpose.msra.mxu0 %v316
    %351 = vmatpush.xpose.msra.mxu0 %v313
    %352 = vmatpush.xpose.msra.mxu0 %v310
    %353 = vmatpush.xpose.msra.mxu0 %v307
    %354 = vmatpush.xpose.msra.mxu0 %v304
    %355 = vmatpush.xpose.msra.mxu0 %v301
    %356 = vmatpush.xpose.msra.mxu0 %v298
    %357 = vmatpush.xpose.msra.mxu0 %v295
    %358 = vmatmul.f32.gmra.mxu0 %v292
    %v359 = vpop.f32.mrf.mxu0
    %v360 = vadd.f32 0.0, %v359
    %361 = vdwg.mxu0
    %v363 = vsel %vm148, %v15, 0
    %v366 = vsel %vm148, %v68, 0
    %v369 = vsel %vm148, %v69, 0
    %v372 = vsel %vm148, %v70, 0
    %v375 = vsel %vm148, %v71, 0
    %v378 = vsel %vm148, %v72, 0
    %v381 = vsel %vm148, %v73, 0
    %v384 = vsel %vm148, %v74, 0
    %v387 = vsel %vm148, %v75, 0
    %v390 = vsel %vm148, %v76, 0
    %v393 = vsel %vm148, %v77, 0
    %v396 = vsel %vm148, %v78, 0
    %v399 = vsel %vm148, %v79, 0
    %v402 = vsel %vm148, %v80, 0
    %v405 = vsel %vm148, %v81, 0
    %v408 = vsel %vm148, %v82, 0
    %v411 = vsel %vm148, %v83, 0
    %413 = vmatpush.xpose.msra.mxu0 %v411
    %414 = vmatpush.xpose.msra.mxu0 %v408
    %415 = vmatpush.xpose.msra.mxu0 %v405
    %416 = vmatpush.xpose.msra.mxu0 %v402
    %417 = vmatpush.xpose.msra.mxu0 %v399
    %418 = vmatpush.xpose.msra.mxu0 %v396
    %419 = vmatpush.xpose.msra.mxu0 %v393
    %420 = vmatpush.xpose.msra.mxu0 %v390
    %421 = vmatpush.xpose.msra.mxu0 %v387
    %422 = vmatpush.xpose.msra.mxu0 %v384
    %423 = vmatpush.xpose.msra.mxu0 %v381
    %424 = vmatpush.xpose.msra.mxu0 %v378
    %425 = vmatpush.xpose.msra.mxu0 %v375
    %426 = vmatpush.xpose.msra.mxu0 %v372
    %427 = vmatpush.xpose.msra.mxu0 %v369
    %428 = vmatpush.xpose.msra.mxu0 %v366
    %429 = vmatmul.f32.gmra.mxu0 %v363
    %v430 = vpop.f32.mrf.mxu0
    %v431 = vadd.f32 0.0, %v430
    %432 = vdwg.mxu0
    %v434 = vsel %vm148, %v16, 0
    %v437 = vsel %vm148, %v84, 0
    %v440 = vsel %vm148, %v85, 0
    %v443 = vsel %vm148, %v86, 0
    %v446 = vsel %vm148, %v87, 0
    %v449 = vsel %vm148, %v88, 0
    %v452 = vsel %vm148, %v89, 0
    %v455 = vsel %vm148, %v90, 0
    %v458 = vsel %vm148, %v91, 0
    %v461 = vsel %vm148, %v92, 0
    %v464 = vsel %vm148, %v93, 0
    %v467 = vsel %vm148, %v94, 0
    %v470 = vsel %vm148, %v95, 0
    %v473 = vsel %vm148, %v96, 0
    %v476 = vsel %vm148, %v97, 0
    %v479 = vsel %vm148, %v98, 0
    %v482 = vsel %vm148, %v99, 0
    %484 = vmatpush.xpose.msra.mxu0 %v482
    %485 = vmatpush.xpose.msra.mxu0 %v479
    %486 = vmatpush.xpose.msra.mxu0 %v476
    %487 = vmatpush.xpose.msra.mxu0 %v473
    %488 = vmatpush.xpose.msra.mxu0 %v470
    %489 = vmatpush.xpose.msra.mxu0 %v467
    %490 = vmatpush.xpose.msra.mxu0 %v464
    %491 = vmatpush.xpose.msra.mxu0 %v461
    %492 = vmatpush.xpose.msra.mxu0 %v458
    %493 = vmatpush.xpose.msra.mxu0 %v455
    %494 = vmatpush.xpose.msra.mxu0 %v452
    %495 = vmatpush.xpose.msra.mxu0 %v449
    %496 = vmatpush.xpose.msra.mxu0 %v446
    %497 = vmatpush.xpose.msra.mxu0 %v443
    %498 = vmatpush.xpose.msra.mxu0 %v440
    %499 = vmatpush.xpose.msra.mxu0 %v437
    %500 = vmatmul.f32.gmra.mxu0 %v434
    %v501 = vpop.f32.mrf.mxu0
    %v502 = vadd.f32 0.0, %v501
    %503 = vdwg.mxu0
    %v505 = vsel %vm148, %v17, 0
    %v508 = vsel %vm148, %v100, 0
    %v511 = vsel %vm148, %v101, 0
    %v514 = vsel %vm148, %v102, 0
    %v517 = vsel %vm148, %v103, 0
    %v520 = vsel %vm148, %v104, 0
    %v523 = vsel %vm148, %v105, 0
    %v526 = vsel %vm148, %v106, 0
    %v529 = vsel %vm148, %v107, 0
    %v532 = vsel %vm148, %v108, 0
    %v535 = vsel %vm148, %v109, 0
    %v538 = vsel %vm148, %v110, 0
    %v541 = vsel %vm148, %v111, 0
    %v544 = vsel %vm148, %v112, 0
    %v547 = vsel %vm148, %v113, 0
    %v550 = vsel %vm148, %v114, 0
    %v553 = vsel %vm148, %v115, 0
    %555 = vmatpush.xpose.msra.mxu0 %v553
    %556 = vmatpush.xpose.msra.mxu0 %v550
    %557 = vmatpush.xpose.msra.mxu0 %v547
    %558 = vmatpush.xpose.msra.mxu0 %v544
    %559 = vmatpush.xpose.msra.mxu0 %v541
    %560 = vmatpush.xpose.msra.mxu0 %v538
    %561 = vmatpush.xpose.msra.mxu0 %v535
    %562 = vmatpush.xpose.msra.mxu0 %v532
    %563 = vmatpush.xpose.msra.mxu0 %v529
    %564 = vmatpush.xpose.msra.mxu0 %v526
    %565 = vmatpush.xpose.msra.mxu0 %v523
    %566 = vmatpush.xpose.msra.mxu0 %v520
    %567 = vmatpush.xpose.msra.mxu0 %v517
    %568 = vmatpush.xpose.msra.mxu0 %v514
    %569 = vmatpush.xpose.msra.mxu0 %v511
    %570 = vmatpush.xpose.msra.mxu0 %v508
    %571 = vmatmul.f32.gmra.mxu0 %v505
    %v572 = vpop.f32.mrf.mxu0
    %v573 = vadd.f32 0.0, %v572
    %574 = vdwg.mxu0
    %v576 = vsel %vm148, %v18, 0
    %v579 = vsel %vm148, %v116, 0
    %v582 = vsel %vm148, %v117, 0
    %v585 = vsel %vm148, %v118, 0
    %v588 = vsel %vm148, %v119, 0
    %v591 = vsel %vm148, %v120, 0
    %v594 = vsel %vm148, %v121, 0
    %v597 = vsel %vm148, %v122, 0
    %v600 = vsel %vm148, %v123, 0
    %v603 = vsel %vm148, %v124, 0
    %v606 = vsel %vm148, %v125, 0
    %v609 = vsel %vm148, %v126, 0
    %v612 = vsel %vm148, %v127, 0
    %v615 = vsel %vm148, %v128, 0
    %v618 = vsel %vm148, %v129, 0
    %v621 = vsel %vm148, %v130, 0
    %v624 = vsel %vm148, %v131, 0
    %626 = vmatpush.xpose.msra.mxu0 %v624
    %627 = vmatpush.xpose.msra.mxu0 %v621
    %628 = vmatpush.xpose.msra.mxu0 %v618
    %629 = vmatpush.xpose.msra.mxu0 %v615
    %630 = vmatpush.xpose.msra.mxu0 %v612
    %631 = vmatpush.xpose.msra.mxu0 %v609
    %632 = vmatpush.xpose.msra.mxu0 %v606
    %633 = vmatpush.xpose.msra.mxu0 %v603
    %634 = vmatpush.xpose.msra.mxu0 %v600
    %635 = vmatpush.xpose.msra.mxu0 %v597
    %636 = vmatpush.xpose.msra.mxu0 %v594
    %637 = vmatpush.xpose.msra.mxu0 %v591
    %638 = vmatpush.xpose.msra.mxu0 %v588
    %639 = vmatpush.xpose.msra.mxu0 %v585
    %640 = vmatpush.xpose.msra.mxu0 %v582
    %641 = vmatpush.xpose.msra.mxu0 %v579
    %642 = vmatmul.f32.gmra.mxu0 %v576
    %v643 = vpop.f32.mrf.mxu0
    %v644 = vadd.f32 0.0, %v643
    %645 = vdwg.mxu0
    %v647 = vsel %vm148, %v19, 0
    %v650 = vsel %vm148, %v132, 0
    %v653 = vsel %vm148, %v133, 0
    %v656 = vsel %vm148, %v134, 0
    %v659 = vsel %vm148, %v135, 0
    %v662 = vsel %vm148, %v136, 0
    %v665 = vsel %vm148, %v137, 0
    %v668 = vsel %vm148, %v138, 0
    %v671 = vsel %vm148, %v139, 0
    %v674 = vsel %vm148, %v140, 0
    %v677 = vsel %vm148, %v141, 0
    %v680 = vsel %vm148, %v142, 0
    %v683 = vsel %vm148, %v143, 0
    %v686 = vsel %vm148, %v144, 0
    %v689 = vsel %vm148, %v145, 0
    %v692 = vsel %vm148, %v146, 0
    %v695 = vsel %vm148, %v147, 0
    %697 = vmatpush.xpose.msra.mxu0 %v695
    %698 = vmatpush.xpose.msra.mxu0 %v692
    %699 = vmatpush.xpose.msra.mxu0 %v689
    %700 = vmatpush.xpose.msra.mxu0 %v686
    %701 = vmatpush.xpose.msra.mxu0 %v683
    %702 = vmatpush.xpose.msra.mxu0 %v680
    %703 = vmatpush.xpose.msra.mxu0 %v677
    %704 = vmatpush.xpose.msra.mxu0 %v674
    %705 = vmatpush.xpose.msra.mxu0 %v671
    %706 = vmatpush.xpose.msra.mxu0 %v668
    %707 = vmatpush.xpose.msra.mxu0 %v665
    %708 = vmatpush.xpose.msra.mxu0 %v662
    %709 = vmatpush.xpose.msra.mxu0 %v659
    %710 = vmatpush.xpose.msra.mxu0 %v656
    %711 = vmatpush.xpose.msra.mxu0 %v653
    %712 = vmatpush.xpose.msra.mxu0 %v650
    %713 = vmatmul.f32.gmra.mxu0 %v647
    %v714 = vpop.f32.mrf.mxu0
    %v715 = vadd.f32 0.0, %v714
    %716 = vdwg.mxu0
    %v717 = vlaneseq
    %v718 = vand.u32 %v717, 127
    %vm719 = vcmp.lt.s32.totalorder %v718, 8
    %v728 = vrot.slane %v289, 7
    %vm729 = vcmask 1041409
    %v730 = vsel %vm729, %v728, %v218
    %v731 = vrot.slane %v360, 6
    %vm732 = vcmask 1042434
    %v733 = vsel %vm732, %v731, %v730
    %v734 = vrot.slane %v431, 5
    %vm735 = vcmask 1043459
    %v736 = vsel %vm735, %v734, %v733
    %v737 = vrot.slane %v502, 4
    %vm738 = vcmask 1044484
    %v739 = vsel %vm738, %v737, %v736
    %v740 = vrot.slane %v573, 3
    %vm741 = vcmask 1045509
    %v742 = vsel %vm741, %v740, %v739
    %v743 = vrot.slane %v644, 2
    %vm744 = vcmask 1046534
    %v745 = vsel %vm744, %v743, %v742
    %v746 = vrot.slane %v715, 1
    %vm747 = vcmask 1047559
    %v748 = vsel %vm747, %v746, %v745
    %v750 = vsel %vm719, %v748, -1e+30
    %751 = vmax.xlane.f32.xlu0 %v750
    %v752 = vpop.xlane.xlu0 %751
    %v753 = vsub.f32 %v750, %v752
    %v754 = vmul.f32 %v753, 1.442695
    %v755 = vpow.pop %v754
    %756 = vadd.xlane.f32.xlu0 %v755
    %v757 = vpop.xlane.xlu0 %756
    %v758 = vrcp.pop %v757
    %v759 = vmul.f32 %v757, %v758
    %v760 = vsub.f32 1.0, %v759
    %v761 = vmul.f32 %v758, %v760
    %v762 = vadd.f32 %v758, %v761
    %vm763 = vweird.f32 %v757
    %vm764 = vweird.f32 %v758
    %vm765 = vmor %vm763, %vm764
    %v766 = vsel %vm765, %v758, %v762
    %v767 = vand.u32 2147483647, %v757
    %vm768 = vcmp.eq.f32.partialorder %v767, 8.507059e+37
    %v769 = vand.u32 %v757, 2147483648
    %v770 = vor.u32 1.1754944e-38, %v769
    %v771 = vsel %vm768, %v770, %v766
    %v772 = vmul.f32 %v755, %v771
    %773 = vst [vmem:[#allocation2] sm:$0xff] %v772
    // Predicated region
    $region10: #{tpu_custom_call.1} parent=1 // pred_check
      _
    $region11: #{tpu_custom_call.1} parent=1 // pred_check_branch
      %775 = sbr.rel (0) target = $region13
    $region12: #{tpu_custom_call.1} parent=1 // pred_region
      %777 = vsyncadd [#allocation3], 0
      %s779 = sshll.u32 [#allocation2], 4
      %s780 = int_to_ptr.vmem [resolvable:$true] %s779
      %s781 = sshll.u32 %s2, 4
      %s782 = int_to_ptr.hbm [resolvable:$true] %s781
      %784 = dma.vmem_to_hbm [thread:$0]  %s780, 128, %s782, [#allocation3]
    $region13: #{tpu_custom_call.1} parent=1 // pred_fallthru
      _
    // Predicated region
    $region14: #{tpu_custom_call.1} parent=1 // pred_check
      _
    $region15: #{tpu_custom_call.1} parent=1 // pred_check_branch
      %786 = sbr.rel (0) target = $region17
    $region16: #{tpu_custom_call.1} parent=1 // pred_region
      %788 = dma.done [#allocation3], 128
    $region17: #{tpu_custom_call.1} parent=1 // pred_fallthru
      _
    %789 = vsyncpa [#allocation3], 1

</llo_original>
